<compile_context>
chip_gen: v7x
topology: tpu7x:2x2x1
jax: 0.10.0
libtpu: 0.0.40
codegen_flags: <defaults>
</compile_context>

<pallas_src>
import jax
import jax.numpy as jnp
from jax.experimental import pallas as pl
from jax.experimental.pallas import tpu as pltpu


# ----------------------------------------------------------------------------
# Pallas kernel: fused 1x1 conv (matmul) + folded-BN affine + SiLU
# ----------------------------------------------------------------------------
def _spd_pw_kernel(x_ref, w_ref, ss_ref, o_ref):
    # MXU matmul: bf16 operands, f32 accumulation.
    z = jnp.dot(x_ref[...], w_ref[...], preferred_element_type=jnp.float32)
    # Folded BatchNorm (eval mode): row 0 = scale, row 1 = shift.
    scale = ss_ref[0:1, :]
    shift = ss_ref[1:2, :]
    z = z * scale + shift
    # SiLU: z * sigmoid(z) = z * 1/(1+exp(-z)); exp + approx reciprocal go to the
    # EUP slot.  Kept in f32 for v5e portability (no bf16 VPU/EUP there).
    out = z * pl.reciprocal(1.0 + jnp.exp(-z), approx=True)
    o_ref[...] = out.astype(o_ref.dtype)


# ----------------------------------------------------------------------------
# Wrapper helpers
# ----------------------------------------------------------------------------
def _round_up(x, m):
    return (x + m - 1) // m * m


def _space_to_depth_rows(x_nchw):
    """Single transpose-copy space-to-depth matching the torch cat channel order.

    (B, C1, H, W) -> (B*Hs*Ws, 4*C1) with column index (2*dw + dh)*C1 + c, which is
    exactly torch.cat([x[...,::2,::2], x[...,1::2,::2], x[...,::2,1::2],
    x[...,1::2,1::2]], dim=1) laid out channels-last.
    """
    B, C1, H, W = x_nchw.shape
    Hs, Ws = H // 2, W // 2
    x6 = x_nchw.reshape(B, C1, Hs, 2, Ws, 2)            # (B, C1, hs, dh, ws, dw)
    x6 = jnp.transpose(x6, (0, 2, 4, 5, 3, 1))          # (B, hs, ws, dw, dh, C1)
    return x6.reshape(B * Hs * Ws, 4 * C1)


def _pick_tm(M, Cin, TN, budget_bytes=8 << 20):
    """Row tile: keep pipelined VMEM buffers under budget, >=2 grid steps for v7x."""
    if M <= 16:
        return int(M)                                    # single block == full extent
    # double-buffered bf16 input + double-buffered bf16 output + f32 epilogue temps
    bytes_per_row = 2 * (Cin * 2) + 2 * (TN * 2) + 2 * (TN * 4)
    tm = budget_bytes // bytes_per_row
    tm = min(tm, 1024, pl.cdiv(M, 2))                    # cap; ensure >= 2 row blocks
    tm = max(16, (tm // 16) * 16)                        # bf16-friendly sublane multiple
    return int(tm)


# ----------------------------------------------------------------------------
# Forward
# ----------------------------------------------------------------------------
def spdconv_forward(x_nchw, params, *, out_dtype=jnp.float32):
    """SPDConv forward. x: (B, C1, H, W) f32 NCHW. Returns (B, C2, H/2, W/2)."""
    B, C1, H, W = x_nchw.shape
    Hs, Ws = H // 2, W // 2
    Cin = 4 * C1

    w = params["w"]                        # (4*C1, C2) == torch weight[c2, cin, 0, 0].T
    scale = params["scale"]                # folded BN scale (C2,)
    shift = params["shift"]                # folded BN shift (C2,)
    C2 = w.shape[1]
    C2p = _round_up(C2, 128)               # lane-dense output channels
    TN = 256 if C2p % 256 == 0 else 128    # MXU-width N tile

    M = B * Hs * Ws
    TM = _pick_tm(M, Cin, TN)

    # Space-to-depth + channels-last + bf16 cast: one fused transpose-copy.
    xm = _space_to_depth_rows(x_nchw).astype(jnp.bfloat16)           # (M, Cin)

    # Zero-pad weight / packed BN params along Cout to the lane-dense width.
    w_p = jnp.zeros((Cin, C2p), jnp.bfloat16).at[:, :C2].set(w.astype(jnp.bfloat16))
    ss_p = jnp.zeros((2, C2p), jnp.float32)
    ss_p = ss_p.at[0, :C2].set(scale.astype(jnp.float32))
    ss_p = ss_p.at[1, :C2].set(shift.astype(jnp.float32))

    grid = (pl.cdiv(M, TM), C2p // TN)

    # VMEM per grid step (double-buffered in/out + weight + f32 epilogue headroom).
    vmem_est = (2 * TM * Cin * 2            # x tiles (bf16)
                + 2 * Cin * TN * 2          # weight tiles (bf16)
                + 2 * 2 * TN * 4            # scale/shift tiles (f32)
                + 2 * TM * TN * 2           # output tiles (bf16)
                + 4 * TM * TN * 4)          # f32 accumulator / epilogue temps
    vmem_limit = int(min(max(2 * vmem_est, 16 << 20), 40 << 20))

    out = pl.pallas_call(
        _spd_pw_kernel,
        out_shape=jax.ShapeDtypeStruct((M, C2p), jnp.bfloat16),
        grid=grid,
        in_specs=[
            pl.BlockSpec((TM, Cin), lambda i, j: (i, 0)),
            pl.BlockSpec((Cin, TN), lambda i, j: (0, j)),
            pl.BlockSpec((2, TN), lambda i, j: (0, j)),
        ],
        out_specs=pl.BlockSpec((TM, TN), lambda i, j: (i, j)),
        compiler_params=pltpu.CompilerParams(
            dimension_semantics=("parallel", "parallel"),
            vmem_limit_bytes=vmem_limit),
    )(xm, w_p, ss_p)

    # Drop channel padding, restore NCHW (slice + convert + transpose fuse in XLA).
    out = out[:, :C2].reshape(B, Hs, Ws, C2).astype(out_dtype)
    return jnp.transpose(out, (0, 3, 1, 2))


# ----------------------------------------------------------------------------
# Deterministic parameter construction (BatchNorm folded in eval mode)
# ----------------------------------------------------------------------------
def _bn_fold(gamma, beta, mean, var, eps=1e-5):
    s = gamma / jnp.sqrt(var + eps)
    return s, beta - mean * s


def init_params(key, c1=4, c2=8):
    k1, k2, k3, k4, k5 = jax.random.split(key, 5)
    w = jax.random.normal(k1, (4 * c1, c2), jnp.float32) * 0.2      # (Cin, Cout)
    gamma = 1.0 + 0.1 * jax.random.normal(k2, (c2,), jnp.float32)
    beta = 0.1 * jax.random.normal(k3, (c2,), jnp.float32)
    mean = 0.1 * jax.random.normal(k4, (c2,), jnp.float32)
    var = 0.9 + jnp.abs(0.1 * jax.random.normal(k5, (c2,), jnp.float32))
    scale, shift = _bn_fold(gamma, beta, mean, var)
    return {"w": w, "scale": scale, "shift": shift}


# ----------------------------------------------------------------------------
# Pure-JAX reference (torch semantics; operands rounded to bf16 like the kernel)
# ----------------------------------------------------------------------------
def _reference(x, p):
    xs = jnp.concatenate([x[:, :, 0::2, 0::2], x[:, :, 1::2, 0::2],
                          x[:, :, 0::2, 1::2], x[:, :, 1::2, 1::2]], axis=1)
    xs = jnp.transpose(xs, (0, 2, 3, 1)).astype(jnp.bfloat16).astype(jnp.float32)
    wr = p["w"].astype(jnp.bfloat16).astype(jnp.float32)
    z = jnp.einsum("bhwc,cd->bhwd", xs, wr)
    z = z * p["scale"] + p["shift"]
    z = z * jax.nn.sigmoid(z)
    return jnp.transpose(z, (0, 3, 1, 2))


# ----------------------------------------------------------------------------
if __name__ == "__main__":
    key = jax.random.PRNGKey(0)
    kp, kx = jax.random.split(key)

    # SPDConv(c1=4, c2=8, k=1) on a (2, 4, 16, 16) NCHW input.
    params = init_params(kp, c1=4, c2=8)
    x = jax.random.normal(kx, (2, 4, 16, 16), jnp.float32)

    forward = jax.jit(spdconv_forward)
    out = forward(x, params)
    jax.block_until_ready(out)

    assert out.shape == (2, 8, 8, 8), out.shape
    assert bool(jnp.isfinite(out).all())

    ref = _reference(x, params)
    assert bool(jnp.allclose(out, ref, atol=5e-2, rtol=5e-2)), float(
        jnp.max(jnp.abs(out - ref)))
    print("KERNEL_OK")
</pallas_src>

<mosaic_0001>
module attributes {stable_mosaic.version = 11 : i64} {
  func.func @_spd_pw_kernel(%arg0: i32, %arg1: i32, %arg2: memref<64x16xbf16, #tpu.memory_space<vmem>>, %arg3: memref<16x128xbf16, #tpu.memory_space<vmem>>, %arg4: memref<2x128xf32, #tpu.memory_space<vmem>>, %arg5: memref<64x128xbf16, #tpu.memory_space<vmem>>) attributes {dimension_semantics = [#tpu.dimension_semantics<parallel>, #tpu.dimension_semantics<parallel>], iteration_bounds = array<i64: 2, 1>, scalar_prefetch = 0 : i64, scratch_operands = 0 : i64, tpu.core_type = #tpu.core_type<tc>, window_params = [{transform_indices = @transform_0, window_bounds = array<i64: 64, 16>}, {transform_indices = @transform_1, window_bounds = array<i64: 16, 128>}, {transform_indices = @transform_2, window_bounds = array<i64: 2, 128>}, {transform_indices = @transform_3, window_bounds = array<i64: 64, 128>}]} {
    %c0 = arith.constant 0 : index
    %c0_0 = arith.constant 0 : index
    %0 = vector.load %arg2[%c0, %c0_0] : memref<64x16xbf16, #tpu.memory_space<vmem>>, vector<64x16xbf16>
    %c0_1 = arith.constant 0 : index
    %c0_2 = arith.constant 0 : index
    %1 = vector.load %arg3[%c0_1, %c0_2] : memref<16x128xbf16, #tpu.memory_space<vmem>>, vector<16x128xbf16>
    %cst = arith.constant dense<0.000000e+00> : vector<64x128xf32>
    %2 = tpu.matmul %0, %1, %cst {dimension_numbers = #tpu.dot_dimension_numbers<[1], [0], [0], [1], [0, 0, 1, 1], [], []>} : vector<64x16xbf16>, vector<16x128xbf16>, vector<64x128xf32> -> vector<64x128xf32>
    %c0_3 = arith.constant 0 : index
    %c0_4 = arith.constant 0 : index
    %3 = vector.load %arg4[%c0_3, %c0_4] : memref<2x128xf32, #tpu.memory_space<vmem>>, vector<1x128xf32>
    %c1 = arith.constant 1 : index
    %c0_5 = arith.constant 0 : index
    %4 = vector.load %arg4[%c1, %c0_5] : memref<2x128xf32, #tpu.memory_space<vmem>>, vector<1x128xf32>
    %5 = vector.broadcast %3 : vector<1x128xf32> to vector<64x128xf32>
    %6 = arith.mulf %2, %5 : vector<64x128xf32>
    %7 = vector.broadcast %4 : vector<1x128xf32> to vector<64x128xf32>
    %8 = arith.addf %6, %7 : vector<64x128xf32>
    %cst_6 = arith.constant 0.000000e+00 : f32
    %9 = vector.broadcast %cst_6 : f32 to vector<64x128xf32>
    %10 = arith.subf %9, %8 : vector<64x128xf32>
    %11 = math.exp %10 : vector<64x128xf32>
    %cst_7 = arith.constant 1.000000e+00 : f32
    %12 = vector.broadcast %cst_7 : f32 to vector<64x128xf32>
    %13 = arith.addf %12, %11 : vector<64x128xf32>
    %14 = tpu.reciprocal %13 {approx = true} : vector<64x128xf32> -> vector<64x128xf32>
    %15 = arith.mulf %8, %14 : vector<64x128xf32>
    %16 = arith.truncf %15 : vector<64x128xf32> to vector<64x128xbf16>
    %c0_8 = arith.constant 0 : index
    %c0_9 = arith.constant 0 : index
    %17 = vector.load %arg5[%c0_8, %c0_9] : memref<64x128xbf16, #tpu.memory_space<vmem>>, vector<64x128xbf16>
    tpu.vector_store %arg5[%c0_8, %c0_9], %16 {strides = array<i32>} : memref<64x128xbf16, #tpu.memory_space<vmem>>, vector<64x128xbf16>,
    return
  }
  func.func @transform_0(%arg0: i32, %arg1: i32) -> (i32, i32) {
    %c0_i32 = arith.constant 0 : i32
    %c0_i32_0 = arith.constant 0 : i32
    return %arg0, %c0_i32 : i32, i32
  }
  func.func @transform_1(%arg0: i32, %arg1: i32) -> (i32, i32) {
    %c0_i32 = arith.constant 0 : i32
    %c0_i32_0 = arith.constant 0 : i32
    return %c0_i32, %arg1 : i32, i32
  }
  func.func @transform_2(%arg0: i32, %arg1: i32) -> (i32, i32) {
    %c0_i32 = arith.constant 0 : i32
    %c0_i32_0 = arith.constant 0 : i32
    return %c0_i32, %arg1 : i32, i32
  }
  func.func @transform_3(%arg0: i32, %arg1: i32) -> (i32, i32) {
    %c0_i32 = arith.constant 0 : i32
    return %arg0, %arg1 : i32, i32
  }
}

</mosaic_0001>

<llo_original>
// kernel: spdconv_forward.1
$region0: #{spdconv_forward.1}
  #allocation0 [shape = 'u32[]', space=smem, size = 0x4, offset = 0x4, fixed_abs, tag = 'smem constant byte address 0x4 - core index']
  #allocation1 [shape = 'u32[144,128]{1,0:T(1,128)}', space=vmem, size = 0x12000, scoped, tag = 'internal scratch']
  %s0 = inlined_call_operand.vmem [shape: bf16[128,16], index: 0, kind: input, shape index: {}]
  %s1 = inlined_call_operand.vmem [shape: bf16[16,128], index: 1, kind: input, shape index: {}]
  %s2 = inlined_call_operand.vmem [shape: f32[2,128], index: 2, kind: input, shape index: {}]
  %s3 = inlined_call_operand.vmem [shape: bf16[128,128], index: 3, kind: output, shape index: {}]
  %s4 = sld [smem:[#allocation0]]
  $region45: #{spdconv_forward.1} parent=0
    _
  %s6 = ssub.s32 1, %s4
  %s7 = scalar_select 0, %s6, %s4
  loop: start=0, step=1, limit=4
  $region2: #{spdconv_forward.1} parent=0 // loop_pre_header
    _
  $region3: #{spdconv_forward.1} parent=0 // loop_header
    %s9 = sphi 0, %s13
    %p10 = scmp.ge.s32.totalorder %s9, 4
    %s16 = sphi 0, %s28
    %s17 = sphi 0, %s24
    %s18 = sphi 0, %s16
    %s19 = sphi 0, %s17
    %s20 = sphi 0, %s18
    %s21 = sphi 0, %s19
    %s31 = sphi 0, %s33
    %s34 = sphi 0, %s31
    %s35 = sphi 0, %s34
    %s51 = sphi 0, %s35
    %s57 = sphi 0, %s59
    %s60 = sphi 0, %s57
    %s61 = sphi 0, %s60
    %s77 = sphi 0, %s61
    %s83 = sphi 0, %s85
    %s86 = sphi 0, %s83
    %s87 = sphi 0, %s86
    %s103 = sphi 0, %s87
    %s111 = sphi 0, %s113
    %s114 = sphi 0, %s111
    %s115 = sphi 0, %s114
    %s131 = sphi 0, %s115
  $region4: #{spdconv_forward.1} parent=0 // loop_header_branch
    %12 = sbr.rel (%p10) target = $region8
  $region5: #{spdconv_forward.1} parent=0 // loop_body
    %s14 = ssub.s32 %s9, 1
    %s15 = ssub.s32 %s9, 2
    %s22 = sadd.s32 1, %s17
    %p23 = scmp.ge.s32.totalorder %s22, 1
    %s24 = scalar_select %p23, 0, %s22
    %s25 = sadd.s32 1, %s16
    %s26 = scalar_select %p23, %s25, %s16
    %p27 = scmp.ge.s32.totalorder %s26, 2
    %s28 = scalar_select %p27, 0, %s26
    %s29 = ssub.s32 %s16, %s28
    %p30 = scmp.eq.s32.totalorder %s29, 0
    %s32 = sadd.s32 %s31, 1
    %s33 = scalar_select %p30, %s31, %s32
    %p36 = pneg %p30
    %p37 = scmp.eq.s32.totalorder %s9, 1
    %p38 = por %p36, %p37
    %p39 = scmp.ne.s32.totalorder %s31, %s34
    %p40 = scmp.eq.s32.totalorder %s9, 0
    %p41 = por %p39, %p40
    %p42 = scmp.ne.s32.totalorder %s31, %s34
    %p43 = scmp.eq.s32.totalorder %s14, 1
    %p44 = por %p42, %p43
    %p45 = scmp.ne.s32.totalorder %s34, %s35
    %p46 = scmp.eq.s32.totalorder %s14, 0
    %p47 = por %p45, %p46
    %p48 = scmp.ne.s32.totalorder %s34, %s35
    %p49 = scmp.eq.s32.totalorder %s15, 1
    %p50 = por %p48, %p49
    %p52 = scmp.ne.s32.totalorder %s35, %s51
    %p53 = scmp.eq.s32.totalorder %s15, 0
    %p54 = por %p52, %p53
    %s55 = ssub.s32 %s17, %s24
    %p56 = scmp.eq.s32.totalorder %s55, 0
    %s58 = sadd.s32 %s57, 1
    %s59 = scalar_select %p56, %s57, %s58
    %p62 = pneg %p56
    %p63 = scmp.eq.s32.totalorder %s9, 1
    %p64 = por %p62, %p63
    %p65 = scmp.ne.s32.totalorder %s57, %s60
    %p66 = scmp.eq.s32.totalorder %s9, 0
    %p67 = por %p65, %p66
    %p68 = scmp.ne.s32.totalorder %s57, %s60
    %p69 = scmp.eq.s32.totalorder %s14, 1
    %p70 = por %p68, %p69
    %p71 = scmp.ne.s32.totalorder %s60, %s61
    %p72 = scmp.eq.s32.totalorder %s14, 0
    %p73 = por %p71, %p72
    %p74 = scmp.ne.s32.totalorder %s60, %s61
    %p75 = scmp.eq.s32.totalorder %s15, 1
    %p76 = por %p74, %p75
    %p78 = scmp.ne.s32.totalorder %s61, %s77
    %p79 = scmp.eq.s32.totalorder %s15, 0
    %p80 = por %p78, %p79
    %s81 = ssub.s32 %s17, %s24
    %p82 = scmp.eq.s32.totalorder %s81, 0
    %s84 = sadd.s32 %s83, 1
    %s85 = scalar_select %p82, %s83, %s84
    %p88 = pneg %p82
    %p89 = scmp.eq.s32.totalorder %s9, 1
    %p90 = por %p88, %p89
    %p91 = scmp.ne.s32.totalorder %s83, %s86
    %p92 = scmp.eq.s32.totalorder %s9, 0
    %p93 = por %p91, %p92
    %p94 = scmp.ne.s32.totalorder %s83, %s86
    %p95 = scmp.eq.s32.totalorder %s14, 1
    %p96 = por %p94, %p95
    %p97 = scmp.ne.s32.totalorder %s86, %s87
    %p98 = scmp.eq.s32.totalorder %s14, 0
    %p99 = por %p97, %p98
    %p100 = scmp.ne.s32.totalorder %s86, %s87
    %p101 = scmp.eq.s32.totalorder %s15, 1
    %p102 = por %p100, %p101
    %p104 = scmp.ne.s32.totalorder %s87, %s103
    %p105 = scmp.eq.s32.totalorder %s15, 0
    %p106 = por %p104, %p105
    %s107 = ssub.s32 %s16, %s28
    %s108 = ssub.s32 %s17, %s24
    %s109 = sor.u32 %s107, %s108
    %p110 = scmp.eq.s32.totalorder %s109, 0
    %s112 = sadd.s32 %s111, 1
    %s113 = scalar_select %p110, %s111, %s112
    %p116 = pneg %p110
    %p117 = scmp.eq.s32.totalorder %s9, 1
    %p118 = por %p116, %p117
    %p119 = scmp.ne.s32.totalorder %s111, %s114
    %p120 = scmp.eq.s32.totalorder %s9, 0
    %p121 = por %p119, %p120
    %p122 = scmp.ne.s32.totalorder %s111, %s114
    %p123 = scmp.eq.s32.totalorder %s14, 1
    %p124 = por %p122, %p123
    %p125 = scmp.ne.s32.totalorder %s114, %s115
    %p126 = scmp.eq.s32.totalorder %s14, 0
    %p127 = por %p125, %p126
    %p128 = scmp.ne.s32.totalorder %s114, %s115
    %p129 = scmp.eq.s32.totalorder %s15, 1
    %p130 = por %p128, %p129
    %p132 = scmp.ne.s32.totalorder %s115, %s131
    %p133 = scmp.eq.s32.totalorder %s15, 0
    %p134 = por %p132, %p133
    %p135 = scmp.le.s32.totalorder 1, %s9
    %p136 = scmp.lt.s32.totalorder %s9, 3
    %p137 = pnand %p135, %p136
    %p138 = pneg %p137
    // Predicated region
    $region9: #{spdconv_forward.1} parent=5 // pred_check
      _
    $region10: #{spdconv_forward.1} parent=5 // pred_check_branch
      %140 = sbr.rel (%p137) target = $region12
    $region11: #{spdconv_forward.1} parent=5 // pred_region
      %s141 = ssub.s32 %s9, 1
      // Predicated region
      $region13: #{spdconv_forward.1} parent=11 // pred_check
        %p142 = pneg %p73
      $region14: #{spdconv_forward.1} parent=11 // pred_check_branch
        %144 = sbr.rel (%p142) target = $region16
      $region15: #{spdconv_forward.1} parent=11 // pred_region
        %p145 = scmp.lt.s32.totalorder %s19, 0
        %s146 = scalar_select %p145, %s19, 0
        %s147 = smul.addr %s146, 4
        %s148 = scalar_lea.vmem %s1, %s147
      $region16: #{spdconv_forward.1} parent=11 // pred_fallthru
        _
      // Predicated region
      $region17: #{spdconv_forward.1} parent=11 // pred_check
        %p149 = pneg %p99
      $region18: #{spdconv_forward.1} parent=11 // pred_check_branch
        %151 = sbr.rel (%p149) target = $region20
      $region19: #{spdconv_forward.1} parent=11 // pred_region
        %p152 = scmp.lt.s32.totalorder %s19, 0
        %s153 = scalar_select %p152, %s19, 0
        %s154 = smul.addr %s153, 2
        %s155 = scalar_lea.vmem %s2, %s154
      $region20: #{spdconv_forward.1} parent=11 // pred_fallthru
        _
    $region12: #{spdconv_forward.1} parent=5 // pred_fallthru
      _
    %p156 = scmp.lt.s32.totalorder %s9, 2
    // Predicated region
    $region21: #{spdconv_forward.1} parent=5 // pred_check
      %p157 = pneg %p156
    $region22: #{spdconv_forward.1} parent=5 // pred_check_branch
      %159 = sbr.rel (%p157) target = $region24
    $region23: #{spdconv_forward.1} parent=5 // pred_region
      // Predicated region
      $region25: #{spdconv_forward.1} parent=23 // pred_check
        %p160 = pneg %p41
      $region26: #{spdconv_forward.1} parent=23 // pred_check_branch
        %162 = sbr.rel (%p160) target = $region28
      $region27: #{spdconv_forward.1} parent=23 // pred_region
        %s163 = smul.u32 8, %s16
        %p164 = scmp.lt.s32.totalorder %s163, 15
        %s165 = scalar_select %p164, %s163, 15
        %s166 = smul.addr %s165, 4
        %s167 = scalar_lea.vmem %s0, %s166
        %s168 = smul.u32 8, %s16
      $region28: #{spdconv_forward.1} parent=23 // pred_fallthru
        _
    $region24: #{spdconv_forward.1} parent=5 // pred_fallthru
      _
    %p169 = scmp.le.s32.totalorder 1, %s9
    %p170 = scmp.lt.s32.totalorder %s9, 3
    %p171 = pnand %p169, %p170
    %p172 = pneg %p171
    // Predicated region
    $region29: #{spdconv_forward.1} parent=5 // pred_check
      _
    $region30: #{spdconv_forward.1} parent=5 // pred_check_branch
      %174 = sbr.rel (%p171) target = $region32
    $region31: #{spdconv_forward.1} parent=5 // pred_region
      %s175 = ssub.s32 %s9, 1
      %s176 = smul.u32 8, %s18
      %p177 = scmp.lt.s32.totalorder %s176, 15
      %s178 = scalar_select %p177, %s176, 15
      %s179 = smul.addr %s178, 4
      %s180 = scalar_lea.vmem %s0, %s179
      %p181 = pneg %p47
      %p182 = pneg %p44
      %p183 = scmp.lt.s32.totalorder %s19, 0
      %s184 = scalar_select %p183, %s19, 0
      %s185 = smul.addr %s184, 4
      %s186 = scalar_lea.vmem %s1, %s185
      %p187 = pneg %p73
      %p188 = pneg %p70
      %p189 = scmp.lt.s32.totalorder %s19, 0
      %s190 = scalar_select %p189, %s19, 0
      %s191 = smul.addr %s190, 2
      %s192 = scalar_lea.vmem %s2, %s191
      %p193 = pneg %p99
      %p194 = pneg %p96
      %p195 = pneg %p127
      %p196 = pneg %p124
      %s197 = smul.u32 8, %s18
      %p198 = scmp.lt.s32.totalorder %s197, 15
      %s199 = scalar_select %p198, %s197, 15
      %p200 = scmp.lt.s32.totalorder %s19, 0
      %s201 = scalar_select %p200, %s19, 0
      %s202 = sadd.s32 %s201, %s199
      %s203 = smul.addr %s202, 4
      %s204 = scalar_lea.vmem %s3, %s203
      %s205 = smul.u32 8, %s18
      %p206 = scmp.lt.s32.totalorder %s205, 15
      %s207 = scalar_select %p206, %s205, 15
      %s208 = smul.addr %s207, 4
      %s209 = scalar_lea.vmem %s0, %s208
      %s210 = smul.u32 8, %s18
      %p211 = scmp.lt.s32.totalorder %s19, 0
      %s212 = scalar_select %p211, %s19, 0
      %s213 = smul.addr %s212, 4
      %s214 = scalar_lea.vmem %s1, %s213
      %p215 = scmp.lt.s32.totalorder %s19, 0
      %s216 = scalar_select %p215, %s19, 0
      %s217 = smul.addr %s216, 2
      %s218 = scalar_lea.vmem %s2, %s217
      %s219 = smul.u32 8, %s18
      %p220 = scmp.lt.s32.totalorder %s219, 15
      %s221 = scalar_select %p220, %s219, 15
      %p222 = scmp.lt.s32.totalorder %s19, 0
      %s223 = scalar_select %p222, %s19, 0
      %s224 = sadd.s32 %s223, %s221
      %s225 = smul.addr %s224, 4
      %s226 = scalar_lea.vmem %s3, %s225
      %s227 = smul.u32 8, %s18
      %v229 = vld [vmem:[%s209] sm:$0xf]
      %v230 = vld [vmem:[%s209 + $0x4] sm:$0xf]
      %v231 = vld [vmem:[%s209 + $0x8] sm:$0xf]
      %v232 = vld [vmem:[%s209 + $0xc] sm:$0xf]
      %v233 = vld [vmem:[%s209 + $0x10] sm:$0xf]
      %v234 = vld [vmem:[%s209 + $0x14] sm:$0xf]
      %v235 = vld [vmem:[%s209 + $0x18] sm:$0xf]
      %v236 = vld [vmem:[%s209 + $0x1c] sm:$0xf]
      %v237 = vld [vmem:[%s214] sm:$0xf]
      %v238 = vld [vmem:[%s214 + $0x4] sm:$0xf]
      %v247 = vunpack.c.l.b16 %v229
      %v248 = vunpack.c.l.b16 %v230
      %v249 = vunpack.c.l.b16 %v231
      %v250 = vunpack.c.l.b16 %v232
      %v251 = vunpack.c.l.b16 %v233
      %v252 = vunpack.c.l.b16 %v234
      %v253 = vunpack.c.l.b16 %v235
      %v254 = vunpack.c.l.b16 %v236
      %v255 = vpack.c.b16 %v248, %v247
      %v256 = vpack.c.b16 %v250, %v249
      %v257 = vpack.c.b16 %v252, %v251
      %v258 = vpack.c.b16 %v254, %v253
      %v261 = vunpack.c.l.b16 %v237
      %v262 = vunpack.c.l.b16 %v238
      %v263 = vpack.c.b16 %v262, %v261
      %vm265 = vcmask 130048
      %v267 = vsel %vm265, %v255, 0
      %v270 = vsel %vm265, %v256, 0
      %v273 = vsel %vm265, %v257, 0
      %v276 = vsel %vm265, %v258, 0
      %278 = vmatprep.subr.bf16.mxu0 0
      %279 = vmatpush1.bf16.msra.mxu0 %v263
      %280 = vmatprep.subr.bf16.mxu0 0
      %281 = vmatpush1.bf16.msra.mxu0 0
      %282 = vmatprep.subr.bf16.mxu0 0
      %283 = vmatpush1.bf16.msra.mxu0 0
      %284 = vmatprep.subr.bf16.mxu0 0
      %285 = vmatpush1.bf16.msra.mxu0 0
      %286 = vmatprep.subr.bf16.mxu0 0
      %287 = vmatpush1.bf16.msra.mxu0 0
      %288 = vmatprep.subr.bf16.mxu0 0
      %289 = vmatpush1.bf16.msra.mxu0 0
      %290 = vmatprep.subr.bf16.mxu0 0
      %291 = vmatpush1.bf16.msra.mxu0 0
      %292 = vmatprep.subr.bf16.mxu0 0
      %293 = vmatpush1.bf16.msra.mxu0 0
      %294 = vmatprep.subr.bf16.mxu0 0
      %295 = vmatpush1.bf16.msra.mxu0 0
      %296 = vmatprep.subr.bf16.mxu0 0
      %297 = vmatpush1.bf16.msra.mxu0 0
      %298 = vmatprep.subr.bf16.mxu0 0
      %299 = vmatpush1.bf16.msra.mxu0 0
      %300 = vmatprep.subr.bf16.mxu0 0
      %301 = vmatpush1.bf16.msra.mxu0 0
      %302 = vmatprep.subr.bf16.mxu0 0
      %303 = vmatpush1.bf16.msra.mxu0 0
      %304 = vmatprep.subr.bf16.mxu0 0
      %305 = vmatpush1.bf16.msra.mxu0 0
      %306 = vmatprep.subr.bf16.mxu0 0
      %307 = vmatpush1.bf16.msra.mxu0 0
      %308 = vmatprep.subr.bf16.mxu0 0
      %309 = vmatpush1.bf16.msra.mxu0 0
      %310 = vmatprep.mubr.bf16.mxu0 0
      %311 = vmatmul.mubr.bf16.gmra.mrb[0].mxu0 %v267
      %v312 = vpop.f32.mrb[0].mxu0
      %v313 = vadd.f32 0.0, %v312
      %v314 = vpop.f32.mrb[0].mxu0
      %v315 = vpop.f32.mrb[0].mxu0
      %v316 = vadd.f32 0.0, %v315
      %v317 = vpop.f32.mrb[0].mxu0
      %318 = vmatprep.mubr.bf16.mxu0 0
      %319 = vmatmul.mubr.bf16.gmra.mrb[0].mxu0 %v270
      %v320 = vpop.f32.mrb[0].mxu0
      %v321 = vadd.f32 0.0, %v320
      %v322 = vpop.f32.mrb[0].mxu0
      %v323 = vpop.f32.mrb[0].mxu0
      %v324 = vadd.f32 0.0, %v323
      %v325 = vpop.f32.mrb[0].mxu0
      %326 = vmatprep.mubr.bf16.mxu0 0
      %327 = vmatmul.mubr.bf16.gmra.mrb[0].mxu0 %v273
      %v328 = vpop.f32.mrb[0].mxu0
      %v329 = vadd.f32 0.0, %v328
      %v330 = vpop.f32.mrb[0].mxu0
      %v331 = vpop.f32.mrb[0].mxu0
      %v332 = vadd.f32 0.0, %v331
      %v333 = vpop.f32.mrb[0].mxu0
      %334 = vmatprep.mubr.bf16.mxu0 0
      %335 = vmatmul.mubr.bf16.gmra.mrb[0].mxu0 %v276
      %v336 = vpop.f32.mrb[0].mxu0
      %v337 = vadd.f32 0.0, %v336
      %v338 = vpop.f32.mrb[0].mxu0
      %v339 = vpop.f32.mrb[0].mxu0
      %v340 = vadd.f32 0.0, %v339
      %v341 = vpop.f32.mrb[0].mxu0
      %342 = vdwg.mxu0
      %v343 = vld [vmem:[%s218] sm:$0x1]
      %v344 = vld [vmem:[%s218 + $0x1] sm:$0x1]
      %v345 = vlaneseq
      %v346 = vshrl.u32 %v345, 7
      %v347 = vsub.s32 0, %v346
      %v348 = vrot.slane %v343, %v347
      %v349 = vmul.f32 %v313, %v348
      %v350 = vmul.f32 %v316, %v348
      %v351 = vmul.f32 %v321, %v348
      %v352 = vmul.f32 %v324, %v348
      %v353 = vmul.f32 %v329, %v348
      %v354 = vmul.f32 %v332, %v348
      %v355 = vmul.f32 %v337, %v348
      %v356 = vmul.f32 %v340, %v348
      %v357 = vlaneseq
      %v358 = vshrl.u32 %v357, 7
      %v359 = vsub.s32 0, %v358
      %v360 = vrot.slane %v344, %v359
      %v361 = vadd.f32 %v349, %v360
      %v362 = vadd.f32 %v350, %v360
      %v363 = vadd.f32 %v351, %v360
      %v364 = vadd.f32 %v352, %v360
      %v365 = vadd.f32 %v353, %v360
      %v366 = vadd.f32 %v354, %v360
      %v367 = vadd.f32 %v355, %v360
      %v368 = vadd.f32 %v356, %v360
      %v369 = vsub.f32 0.0, %v361
      %v370 = vsub.f32 0.0, %v362
      %v371 = vsub.f32 0.0, %v363
      %v372 = vsub.f32 0.0, %v364
      %v373 = vsub.f32 0.0, %v365
      %v374 = vsub.f32 0.0, %v366
      %v375 = vsub.f32 0.0, %v367
      %v376 = vsub.f32 0.0, %v368
      %v377 = vmul.f32 %v369, 1.442695
      %v378 = vpow.pop %v377
      %v379 = vmul.f32 %v370, 1.442695
      %v380 = vpow.pop %v379
      %v381 = vmul.f32 %v371, 1.442695
      %v382 = vpow.pop %v381
      %v383 = vmul.f32 %v372, 1.442695
      %v384 = vpow.pop %v383
      %v385 = vmul.f32 %v373, 1.442695
      %v386 = vpow.pop %v385
      %v387 = vmul.f32 %v374, 1.442695
      %v388 = vpow.pop %v387
      %v389 = vmul.f32 %v375, 1.442695
      %v390 = vpow.pop %v389
      %v391 = vmul.f32 %v376, 1.442695
      %v392 = vpow.pop %v391
      %v393 = vadd.f32 %v378, 1.0
      %v394 = vadd.f32 %v380, 1.0
      %v395 = vadd.f32 %v382, 1.0
      %v396 = vadd.f32 %v384, 1.0
      %v397 = vadd.f32 %v386, 1.0
      %v398 = vadd.f32 %v388, 1.0
      %v399 = vadd.f32 %v390, 1.0
      %v400 = vadd.f32 %v392, 1.0
      %v401 = vrcp.pop %v393
      %v402 = vrcp.pop %v394
      %v403 = vrcp.pop %v395
      %v404 = vrcp.pop %v396
      %v405 = vrcp.pop %v397
      %v406 = vrcp.pop %v398
      %v407 = vrcp.pop %v399
      %v408 = vrcp.pop %v400
      %v409 = vmul.f32 %v361, %v401
      %v410 = vmul.f32 %v362, %v402
      %v411 = vmul.f32 %v363, %v403
      %v412 = vmul.f32 %v364, %v404
      %v413 = vmul.f32 %v365, %v405
      %v414 = vmul.f32 %v366, %v406
      %v415 = vmul.f32 %v367, %v407
      %v416 = vmul.f32 %v368, %v408
      %v417 = vpack.c.bf16 %v410, %v409
      %v418 = vpack.c.bf16 %v412, %v411
      %v419 = vpack.c.bf16 %v414, %v413
      %v420 = vpack.c.bf16 %v416, %v415
      %v425 = vunpack.c.l.b16 %v417
      %v426 = vunpack.c.h.b16 %v417
      %v427 = vunpack.c.l.b16 %v418
      %v428 = vunpack.c.h.b16 %v418
      %v429 = vunpack.c.l.b16 %v419
      %v430 = vunpack.c.h.b16 %v419
      %v431 = vunpack.c.l.b16 %v420
      %v432 = vunpack.c.h.b16 %v420
      %v433 = vpack.c.b16 %v425, %v425
      %v434 = vpack.c.b16 %v426, %v426
      %v435 = vpack.c.b16 %v427, %v427
      %v436 = vpack.c.b16 %v428, %v428
      %v437 = vpack.c.b16 %v429, %v429
      %v438 = vpack.c.b16 %v430, %v430
      %v439 = vpack.c.b16 %v431, %v431
      %v440 = vpack.c.b16 %v432, %v432
      %449 = vst [vmem:[%s226] sm:$0xf] %v433
      %450 = vst [vmem:[%s226 + $0x4] sm:$0xf] %v434
      %451 = vst [vmem:[%s226 + $0x8] sm:$0xf] %v435
      %452 = vst [vmem:[%s226 + $0xc] sm:$0xf] %v436
      %453 = vst [vmem:[%s226 + $0x10] sm:$0xf] %v437
      %454 = vst [vmem:[%s226 + $0x14] sm:$0xf] %v438
      %455 = vst [vmem:[%s226 + $0x18] sm:$0xf] %v439
      %456 = vst [vmem:[%s226 + $0x1c] sm:$0xf] %v440
      %s457 = smul.u32 8, %s18
      %p458 = scmp.lt.s32.totalorder %s457, 15
      %s459 = scalar_select %p458, %s457, 15
      %p460 = scmp.lt.s32.totalorder %s19, 0
      %s461 = scalar_select %p460, %s19, 0
      %s462 = sadd.s32 %s461, %s459
      %s463 = smul.addr %s462, 4
      %s464 = scalar_lea.vmem %s3, %s463
      // Predicated region
      $region33: #{spdconv_forward.1} parent=31 // pred_check
        %p465 = pneg %p124
      $region34: #{spdconv_forward.1} parent=31 // pred_check_branch
        %467 = sbr.rel (%p465) target = $region36
      $region35: #{spdconv_forward.1} parent=31 // pred_region
        %s468 = smul.u32 8, %s18
      $region36: #{spdconv_forward.1} parent=31 // pred_fallthru
        _
    $region32: #{spdconv_forward.1} parent=5 // pred_fallthru
      _
    %p469 = scmp.le.s32.totalorder 2, %s9
    // Predicated region
    $region37: #{spdconv_forward.1} parent=5 // pred_check
      %p470 = pneg %p469
    $region38: #{spdconv_forward.1} parent=5 // pred_check_branch
      %472 = sbr.rel (%p470) target = $region40
    $region39: #{spdconv_forward.1} parent=5 // pred_region
      %s473 = ssub.s32 %s9, 2
      // Predicated region
      $region41: #{spdconv_forward.1} parent=39 // pred_check
        %p474 = pneg %p130
      $region42: #{spdconv_forward.1} parent=39 // pred_check_branch
        %476 = sbr.rel (%p474) target = $region44
      $region43: #{spdconv_forward.1} parent=39 // pred_region
        %s477 = smul.u32 8, %s20
        %p478 = scmp.lt.s32.totalorder %s477, 15
        %s479 = scalar_select %p478, %s477, 15
        %p480 = scmp.lt.s32.totalorder %s21, 0
        %s481 = scalar_select %p480, %s21, 0
        %s482 = sadd.s32 %s481, %s479
        %s483 = smul.addr %s482, 4
        %s484 = scalar_lea.vmem %s3, %s483
      $region44: #{spdconv_forward.1} parent=39 // pred_fallthru
        _
    $region40: #{spdconv_forward.1} parent=5 // pred_fallthru
      _
  $region6: #{spdconv_forward.1} parent=0 // loop_footer
    %s13 = sadd.s32 1, %s9
  $region7: #{spdconv_forward.1} parent=0 // loop_footer_branch
    %8 = sbr.rel target = $region3
  $region8: #{spdconv_forward.1} parent=0 // loop_exit
    _

</llo_original>
